<compile_context>
chip_gen: v7x
topology: tpu7x:2x2x1
jax: 0.10.0
libtpu: 0.0.40
codegen_flags: <defaults>
</compile_context>

<pallas_src>
import functools

import jax
import jax.numpy as jnp
from jax import lax
from jax.experimental import pallas as pl
from jax.experimental.pallas import tpu as pltpu

LANES = 128
MAX_TILE_ROWS = 8192        # 8192*128*4B = 4 MiB f32 per input per grid step
CHUNK_ROWS = 512            # in-kernel compute sub-chunk (256 KiB f32 per operand)
MIN_PALLAS_ELEMS = 1 << 16  # below this the fused jnp expression is strictly faster


def _sublane_multiple(dtype):
    # Native TPU tiling: (8,128) for 4-byte, (16,128) for 2-byte, (32,128) for 1-byte.
    return {4: 8, 2: 16, 1: 32}.get(jnp.dtype(dtype).itemsize, 8)


def _bce_with_logits(x, y, pos_weight):
    # Numerically stable; matches torch.nn.BCEWithLogitsLoss(pos_weight=pw):
    #   loss = (1 - y) * softplus(x) + pos_weight * y * softplus(-x)
    sp_pos = jnp.maximum(x, 0.0) + jnp.log1p(jnp.exp(-jnp.abs(x)))   # softplus(x)
    sp_neg = sp_pos - x                                              # softplus(-x)
    return (1.0 - y) * sp_pos + pos_weight * y * sp_neg


def _bce_partial_kernel(pred_ref, gt_ref, out_ref, *, pos_weight, n_total,
                        tile_rows, chunk_rows, needs_mask):
    """One grid step: stream a (tile_rows,128) tile, fold to an (8,128) partial sum."""
    nchunks = tile_rows // chunk_rows
    base_row = pl.program_id(0) * tile_rows

    if needs_mask:
        # Hoisted out of the chunk loop (JAX does not CSE broadcast_in_dim).
        rid = lax.broadcasted_iota(jnp.int32, (chunk_rows, LANES), 0)
        lid = lax.broadcasted_iota(jnp.int32, (chunk_rows, LANES), 1)

    def chunk_partial(c):
        r0 = c * chunk_rows
        if not isinstance(r0, int):
            r0 = pl.multiple_of(r0, chunk_rows)
        x = pred_ref[pl.ds(r0, chunk_rows), :].astype(jnp.float32)
        y = gt_ref[pl.ds(r0, chunk_rows), :].astype(jnp.float32)
        loss = _bce_with_logits(x, y, pos_weight)
        if needs_mask:
            # Mask elements past the true element count: the <128-element tail pad
            # and the undefined rows of a partial boundary block.  jnp.where is a
            # select, so garbage/NaN in masked lanes cannot leak into the sum.
            gidx = (base_row + r0 + rid) * LANES + lid
            loss = jnp.where(gidx < n_total, loss, 0.0)
        # (chunk_rows,128) -> (8,128): whole-vreg adds on the VPU, no XLU reduce.
        return loss.reshape(-1, 8, LANES).sum(axis=0)

    if nchunks == 1:
        out_ref[...] = chunk_partial(0)
    else:
        out_ref[...] = lax.fori_loop(
            0, nchunks, lambda c, acc: acc + chunk_partial(c),
            jnp.zeros((8, LANES), jnp.float32), unroll=True)


def lss_segm_loss_pallas(pred, gt, pos_weight=2.13):
    """Pallas implementation of mean BCEWithLogitsLoss(pos_weight)."""
    assert pred.shape == gt.shape
    n = int(pred.size)

    pred_flat = pred.reshape(-1)   # free (bitcast) for contiguous inputs
    gt_flat = gt.reshape(-1)

    sub = max(_sublane_multiple(pred.dtype), _sublane_multiple(gt.dtype))
    rows = (n + LANES - 1) // LANES
    if rows < sub:
        # Too small for a lane-dense tile; the fused jnp expression wins anyway.
        return _reference_loss(pred, gt, pos_weight)

    pad = rows * LANES - n
    if pad:
        # Only when n % 128 != 0 (<=127 elements); pad value is irrelevant (masked
        # in-kernel).  Typical LSS shapes (B*C*H*W multiple of 128) skip this.
        # TODO(synk): avoiding this copy entirely needs manual 1-D HBM DMA.
        pred_flat = jnp.pad(pred_flat, (0, pad))
        gt_flat = jnp.pad(gt_flat, (0, pad))

    pred2d = pred_flat.reshape(rows, LANES)
    gt2d = gt_flat.reshape(rows, LANES)

    if rows >= CHUNK_ROWS:
        chunk_rows = CHUNK_ROWS
        # Cap at ~rows/2 (chunk-aligned) so large inputs give >=2 independent grid
        # blocks -> both TensorCores on v7x; bound by MAX_TILE_ROWS for VMEM.
        tile_rows = min(MAX_TILE_ROWS,
                        max(chunk_rows, (rows // (2 * chunk_rows)) * chunk_rows))
    else:
        chunk_rows = (rows // sub) * sub
        tile_rows = chunk_rows

    num_blocks = (rows + tile_rows - 1) // tile_rows
    needs_mask = (num_blocks * tile_rows * LANES) != n

    kernel = functools.partial(
        _bce_partial_kernel, pos_weight=float(pos_weight), n_total=n,
        tile_rows=tile_rows, chunk_rows=chunk_rows, needs_mask=needs_mask)

    cost = pl.CostEstimate(
        flops=10 * n,
        transcendentals=2 * n,
        bytes_accessed=n * (pred2d.dtype.itemsize + gt2d.dtype.itemsize)
        + num_blocks * 8 * LANES * 4,
    )

    partials = pl.pallas_call(
        kernel,
        out_shape=jax.ShapeDtypeStruct((num_blocks * 8, LANES), jnp.float32),
        grid_spec=pltpu.PrefetchScalarGridSpec(
            num_scalar_prefetch=0,
            grid=(num_blocks,),
            in_specs=[
                pl.BlockSpec((tile_rows, LANES), lambda i: (i, 0)),
                pl.BlockSpec((tile_rows, LANES), lambda i: (i, 0)),
            ],
            out_specs=pl.BlockSpec((8, LANES), lambda i: (i, 0)),
        ),
        compiler_params=pltpu.CompilerParams(
            dimension_semantics=("parallel",),       # independent blocks
            vmem_limit_bytes=32 * 1024 * 1024),
        cost_estimate=cost,
    )(pred2d, gt2d)

    return jnp.sum(partials) / jnp.float32(n)


def _reference_loss(pred, gt, pos_weight=2.13):
    return jnp.mean(_bce_with_logits(pred.astype(jnp.float32),
                                     gt.astype(jnp.float32), float(pos_weight)))


def lss_segm_loss(pred, gt, pos_weight=2.13):
    """Equivalent of LSSSegmLoss.forward: mean BCEWithLogitsLoss(pos_weight)."""
    if int(pred.size) < MIN_PALLAS_ELEMS:
        return _reference_loss(pred, gt, pos_weight)    # fused-XLA fast path
    return lss_segm_loss_pallas(pred, gt, pos_weight)


if __name__ == "__main__":
    # Module configuration (only pos_weight affects forward()).
    segm_size = (16, 16)
    targets = ["vehicle", "human", "drivable_area", "lane_divider"]
    maps = ["vehicle", "human", "map", "map"]
    n_classes = len(dict.fromkeys(maps))   # 3 unique class names
    pos_weight = 2.13
    # TODO(synk): generate_gt uses cv2 polygon/line rasterization from host-side box
    # metadata; no Pallas equivalent — gt is supplied directly as a dense tensor here.

    key = jax.random.PRNGKey(0)
    k_pred, k_gt = jax.random.split(key)

    # Case 1: module-default spatial size, n % 128 == 0, partial last grid block.
    B, H, W = 2, segm_size[0], segm_size[1]
    pred = jax.random.normal(k_pred, (B, n_classes, H, W), dtype=jnp.float32)
    gt = (jax.random.uniform(k_gt, (B, n_classes, H, W)) > 0.7).astype(jnp.float32)
    loss = jax.block_until_ready(lss_segm_loss_pallas(pred, gt, pos_weight=pos_weight))
    ref = _reference_loss(pred, gt, pos_weight=pos_weight)
    assert jnp.allclose(loss, ref, rtol=1e-5, atol=1e-6), (loss, ref)

    # Case 2: ragged total (n % 128 != 0) exercising the tail pad + element mask.
    H2, W2 = 17, 19
    pred2 = jax.random.normal(k_pred, (B, n_classes, H2, W2), dtype=jnp.float32)
    gt2 = (jax.random.uniform(k_gt, (B, n_classes, H2, W2)) > 0.7).astype(jnp.float32)
    loss2 = jax.block_until_ready(lss_segm_loss_pallas(pred2, gt2, pos_weight=pos_weight))
    ref2 = _reference_loss(pred2, gt2, pos_weight=pos_weight)
    assert jnp.allclose(loss2, ref2, rtol=1e-5, atol=1e-6), (loss2, ref2)

    print("KERNEL_OK")
</pallas_src>

<mosaic_0001>
module attributes {stable_mosaic.version = 11 : i64} {
  func.func @_bce_partial_kernel(%arg0: i32, %arg1: memref<8x128xf32, #tpu.memory_space<vmem>>, %arg2: memref<8x128xf32, #tpu.memory_space<vmem>>, %arg3: memref<8x128xf32, #tpu.memory_space<vmem>>) attributes {dimension_semantics = [#tpu.dimension_semantics<parallel>], iteration_bounds = array<i64: 2>, scalar_prefetch = 0 : i64, scratch_operands = 0 : i64, tpu.core_type = #tpu.core_type<tc>, window_params = [{transform_indices = @transform_0, window_bounds = array<i64: 8, 128>}, {transform_indices = @transform_1, window_bounds = array<i64: 8, 128>}, {transform_indices = @transform_2, window_bounds = array<i64: 8, 128>}]} {
    %c8_i32 = arith.constant 8 : i32
    %0 = arith.muli %arg0, %c8_i32 : i32
    %1 = tpu.iota {dimensions = array<i32: 0>} : vector<8x128xi32>
    %2 = tpu.iota {dimensions = array<i32: 1>} : vector<8x128xi32>
    %c0 = arith.constant 0 : index
    %c0_0 = arith.constant 0 : index
    %3 = vector.load %arg1[%c0, %c0_0] : memref<8x128xf32, #tpu.memory_space<vmem>>, vector<8x128xf32>
    %c0_1 = arith.constant 0 : index
    %c0_2 = arith.constant 0 : index
    %4 = vector.load %arg2[%c0_1, %c0_2] : memref<8x128xf32, #tpu.memory_space<vmem>>, vector<8x128xf32>
    %cst = arith.constant 0.000000e+00 : f32
    %5 = vector.broadcast %cst : f32 to vector<8x128xf32>
    %6 = arith.maximumf %3, %5 : vector<8x128xf32>
    %7 = math.absf %3 : vector<8x128xf32>
    %cst_3 = arith.constant 0.000000e+00 : f32
    %8 = vector.broadcast %cst_3 : f32 to vector<8x128xf32>
    %9 = arith.subf %8, %7 : vector<8x128xf32>
    %10 = math.exp %9 : vector<8x128xf32>
    %11 = math.log1p %10 : vector<8x128xf32>
    %12 = arith.addf %6, %11 : vector<8x128xf32>
    %13 = arith.subf %12, %3 : vector<8x128xf32>
    %cst_4 = arith.constant 1.000000e+00 : f32
    %14 = vector.broadcast %cst_4 : f32 to vector<8x128xf32>
    %15 = arith.subf %14, %4 : vector<8x128xf32>
    %16 = arith.mulf %15, %12 : vector<8x128xf32>
    %cst_5 = arith.constant 2.130000e+00 : f32
    %17 = vector.broadcast %cst_5 : f32 to vector<8x128xf32>
    %18 = arith.mulf %17, %4 : vector<8x128xf32>
    %19 = arith.mulf %18, %13 : vector<8x128xf32>
    %20 = arith.addf %16, %19 : vector<8x128xf32>
    %c0_i32 = arith.constant 0 : i32
    %21 = arith.addi %0, %c0_i32 : i32
    %22 = vector.broadcast %21 : i32 to vector<8x128xi32>
    %23 = arith.addi %22, %1 : vector<8x128xi32>
    %c128_i32 = arith.constant 128 : i32
    %24 = vector.broadcast %c128_i32 : i32 to vector<8x128xi32>
    %25 = arith.muli %23, %24 : vector<8x128xi32>
    %26 = arith.addi %25, %2 : vector<8x128xi32>
    %c1536_i32 = arith.constant 1536 : i32
    %27 = vector.broadcast %c1536_i32 : i32 to vector<8x128xi32>
    %28 = arith.cmpi slt, %26, %27 : vector<8x128xi32>
    %cst_6 = arith.constant 0.000000e+00 : f32
    %29 = vector.broadcast %cst_6 : f32 to vector<8x128xf32>
    %30 = arith.select %28, %20, %29 : vector<8x128xi1>, vector<8x128xf32>
    %31 = vector.shape_cast %30 : vector<8x128xf32> to vector<1x8x128xf32>
    %cst_7 = arith.constant dense<0.000000e+00> : vector<8x128xf32>
    %32 = vector.multi_reduction <add>, %31, %cst_7 [0] : vector<1x8x128xf32> to vector<8x128xf32>
    %c0_8 = arith.constant 0 : index
    %c0_9 = arith.constant 0 : index
    %33 = vector.load %arg3[%c0_8, %c0_9] : memref<8x128xf32, #tpu.memory_space<vmem>>, vector<8x128xf32>
    tpu.vector_store %arg3[%c0_8, %c0_9], %32 {strides = array<i32>} : memref<8x128xf32, #tpu.memory_space<vmem>>, vector<8x128xf32>,
    return
  }
  func.func @transform_0(%arg0: i32) -> (i32, i32) {
    %c0_i32 = arith.constant 0 : i32
    %c0_i32_0 = arith.constant 0 : i32
    return %arg0, %c0_i32 : i32, i32
  }
  func.func @transform_1(%arg0: i32) -> (i32, i32) {
    %c0_i32 = arith.constant 0 : i32
    %c0_i32_0 = arith.constant 0 : i32
    return %arg0, %c0_i32 : i32, i32
  }
  func.func @transform_2(%arg0: i32) -> (i32, i32) {
    %c0_i32 = arith.constant 0 : i32
    %c0_i32_0 = arith.constant 0 : i32
    return %arg0, %c0_i32 : i32, i32
  }
}

</mosaic_0001>

<llo_original>
// kernel: tpu_custom_call.1
$region0: #{tpu_custom_call.1}
  #allocation0 [shape = 'u32[]', space=smem, size = 0x4, offset = 0x4, fixed_abs, tag = 'smem constant byte address 0x4 - core index']
  #allocation1 [shape = 'u32[144,128]{1,0:T(1,128)}', space=vmem, size = 0x12000, scoped, tag = 'internal scratch']
  %s0 = inlined_call_operand.hbm [shape: f32[12,128], index: 0, kind: input, shape index: {}]
  %s1 = inlined_call_operand.hbm [shape: f32[12,128], index: 1, kind: input, shape index: {}]
  %s2 = inlined_call_operand.hbm [shape: f32[16,128], index: 2, kind: output, shape index: {}]
  %s3 = sld [smem:[#allocation0]]
  $region49: #{tpu_custom_call.1} parent=0
    _
  %s5 = ssub.s32 1, %s3
  %s6 = scalar_select 0, %s5, %s3
  $region1: #{tpu_custom_call.1} parent=0
    #allocation2 [shape = 'u8[8192]{0}', space=vmem, size = 0x2000, scoped, tag = 'input window, operand 0']
    #allocation3 [shape = 's32[2]{0}', space=sflag, size = 0x8, scoped, tag = 'scoped memory for tpu_custom_call.1']
    #allocation4 [shape = 's32[2]{0}', space=sflag, size = 0x8, scoped, tag = 'scoped memory for tpu_custom_call.1']
    #allocation5 [shape = 'u8[8192]{0}', space=vmem, size = 0x2000, scoped, tag = 'input window, operand 1']
    #allocation6 [shape = 's32[2]{0}', space=sflag, size = 0x8, scoped, tag = 'scoped memory for tpu_custom_call.1']
    #allocation7 [shape = 'u8[8192]{0}', space=vmem, size = 0x2000, scoped, tag = 'output window, operand 0']
    %7 = vsyncpa [#allocation3], 0
    %s8 = scalar_lea.sflag [#allocation3], 1
    %9 = vsyncpa %s8, 0
    %10 = vsyncpa [#allocation6], 0
    %s11 = scalar_lea.sflag [#allocation6], 1
    %12 = vsyncpa %s11, 0
    %13 = vsyncpa [#allocation4], 0
    %s14 = scalar_lea.sflag [#allocation4], 1
    %15 = vsyncpa %s14, 0
    loop: start=0, step=1, limit=4
    $region2: #{tpu_custom_call.1} parent=1 // loop_pre_header
      _
    $region3: #{tpu_custom_call.1} parent=1 // loop_header
      %s17 = sphi 0, %s21
      %p18 = scmp.ge.s32.totalorder %s17, 4
      %s27 = sphi 0, %s29
      %s30 = sphi 0, %s27
      %s31 = sphi 0, %s30
      %s47 = sphi 0, %s31
      %s53 = sphi 0, %s55
      %s56 = sphi 0, %s53
      %s57 = sphi 0, %s56
      %s73 = sphi 0, %s57
      %s79 = sphi 0, %s81
      %s82 = sphi 0, %s79
      %s83 = sphi 0, %s82
      %s99 = sphi 0, %s83
    $region4: #{tpu_custom_call.1} parent=1 // loop_header_branch
      %20 = sbr.rel (%p18) target = $region8
    $region5: #{tpu_custom_call.1} parent=1 // loop_body
      %s22 = ssub.s32 %s17, 1
      %s23 = ssub.s32 %s17, 2
      %s24 = sadd.s32 %s17, 1
      %s25 = ssub.s32 %s17, %s24
      %p26 = scmp.eq.s32.totalorder %s25, 0
      %s28 = sadd.s32 %s27, 1
      %s29 = scalar_select %p26, %s27, %s28
      %p32 = pneg %p26
      %p33 = scmp.eq.s32.totalorder %s17, 1
      %p34 = por %p32, %p33
      %p35 = scmp.ne.s32.totalorder %s27, %s30
      %p36 = scmp.eq.s32.totalorder %s17, 0
      %p37 = por %p35, %p36
      %p38 = scmp.ne.s32.totalorder %s27, %s30
      %p39 = scmp.eq.s32.totalorder %s22, 1
      %p40 = por %p38, %p39
      %p41 = scmp.ne.s32.totalorder %s30, %s31
      %p42 = scmp.eq.s32.totalorder %s22, 0
      %p43 = por %p41, %p42
      %p44 = scmp.ne.s32.totalorder %s30, %s31
      %p45 = scmp.eq.s32.totalorder %s23, 1
      %p46 = por %p44, %p45
      %p48 = scmp.ne.s32.totalorder %s31, %s47
      %p49 = scmp.eq.s32.totalorder %s23, 0
      %p50 = por %p48, %p49
      %s51 = ssub.s32 %s17, %s24
      %p52 = scmp.eq.s32.totalorder %s51, 0
      %s54 = sadd.s32 %s53, 1
      %s55 = scalar_select %p52, %s53, %s54
      %p58 = pneg %p52
      %p59 = scmp.eq.s32.totalorder %s17, 1
      %p60 = por %p58, %p59
      %p61 = scmp.ne.s32.totalorder %s53, %s56
      %p62 = scmp.eq.s32.totalorder %s17, 0
      %p63 = por %p61, %p62
      %p64 = scmp.ne.s32.totalorder %s53, %s56
      %p65 = scmp.eq.s32.totalorder %s22, 1
      %p66 = por %p64, %p65
      %p67 = scmp.ne.s32.totalorder %s56, %s57
      %p68 = scmp.eq.s32.totalorder %s22, 0
      %p69 = por %p67, %p68
      %p70 = scmp.ne.s32.totalorder %s56, %s57
      %p71 = scmp.eq.s32.totalorder %s23, 1
      %p72 = por %p70, %p71
      %p74 = scmp.ne.s32.totalorder %s57, %s73
      %p75 = scmp.eq.s32.totalorder %s23, 0
      %p76 = por %p74, %p75
      %s77 = ssub.s32 %s17, %s24
      %p78 = scmp.eq.s32.totalorder %s77, 0
      %s80 = sadd.s32 %s79, 1
      %s81 = scalar_select %p78, %s79, %s80
      %p84 = pneg %p78
      %p85 = scmp.eq.s32.totalorder %s17, 1
      %p86 = por %p84, %p85
      %p87 = scmp.ne.s32.totalorder %s79, %s82
      %p88 = scmp.eq.s32.totalorder %s17, 0
      %p89 = por %p87, %p88
      %p90 = scmp.ne.s32.totalorder %s79, %s82
      %p91 = scmp.eq.s32.totalorder %s22, 1
      %p92 = por %p90, %p91
      %p93 = scmp.ne.s32.totalorder %s82, %s83
      %p94 = scmp.eq.s32.totalorder %s22, 0
      %p95 = por %p93, %p94
      %p96 = scmp.ne.s32.totalorder %s82, %s83
      %p97 = scmp.eq.s32.totalorder %s23, 1
      %p98 = por %p96, %p97
      %p100 = scmp.ne.s32.totalorder %s83, %s99
      %p101 = scmp.eq.s32.totalorder %s23, 0
      %p102 = por %p100, %p101
      %p103 = scmp.le.s32.totalorder 1, %s17
      %p104 = scmp.lt.s32.totalorder %s17, 3
      %p105 = pnand %p103, %p104
      %p106 = pneg %p105
      // Predicated region
      $region9: #{tpu_custom_call.1} parent=5 // pred_check
        _
      $region10: #{tpu_custom_call.1} parent=5 // pred_check_branch
        %108 = sbr.rel (%p105) target = $region12
      $region11: #{tpu_custom_call.1} parent=5 // pred_region
        %s109 = ssub.s32 %s17, 1
      $region12: #{tpu_custom_call.1} parent=5 // pred_fallthru
        _
      %p110 = scmp.lt.s32.totalorder %s17, 2
      // Predicated region
      $region13: #{tpu_custom_call.1} parent=5 // pred_check
        %p111 = pneg %p110
      $region14: #{tpu_custom_call.1} parent=5 // pred_check_branch
        %113 = sbr.rel (%p111) target = $region16
      $region15: #{tpu_custom_call.1} parent=5 // pred_region
        // Predicated region
        $region17: #{tpu_custom_call.1} parent=15 // pred_check
          %p114 = pneg %p37
        $region18: #{tpu_custom_call.1} parent=15 // pred_check_branch
          %116 = sbr.rel (%p114) target = $region20
        $region19: #{tpu_custom_call.1} parent=15 // pred_region
          %s117 = sand.u32 %s27, 1
          %s118 = scalar_lea.sflag [#allocation3], %s117
          %s119 = sand.u32 %s27, 1
          %s120 = smul.addr %s119, 8
          %s121 = scalar_lea.vmem [#allocation2], %s120
          %s123 = ssub.s32 128, 128
          %124 = vsyncadd %s118, %s123
          %s125 = smul.addr %s17, 128
          %s126 = scalar_lea.hbm %s0, %s125
          %s128 = sshll.u32 %s121, 4
          %s129 = int_to_ptr.vmem [resolvable:$true] %s128
          %131 = dma.hbm_to_vmem [thread:$0]  %s126, 128, %s129, %s118
        $region20: #{tpu_custom_call.1} parent=15 // pred_fallthru
          _
        // Predicated region
        $region21: #{tpu_custom_call.1} parent=15 // pred_check
          %p132 = pneg %p63
        $region22: #{tpu_custom_call.1} parent=15 // pred_check_branch
          %134 = sbr.rel (%p132) target = $region24
        $region23: #{tpu_custom_call.1} parent=15 // pred_region
          %s135 = sand.u32 %s53, 1
          %s136 = scalar_lea.sflag [#allocation6], %s135
          %s137 = sand.u32 %s53, 1
          %s138 = smul.addr %s137, 8
          %s139 = scalar_lea.vmem [#allocation5], %s138
          %s141 = ssub.s32 128, 128
          %142 = vsyncadd %s136, %s141
          %s143 = smul.addr %s17, 128
          %s144 = scalar_lea.hbm %s1, %s143
          %s146 = sshll.u32 %s139, 4
          %s147 = int_to_ptr.vmem [resolvable:$true] %s146
          %149 = dma.hbm_to_vmem [thread:$0]  %s144, 128, %s147, %s136
        $region24: #{tpu_custom_call.1} parent=15 // pred_fallthru
          _
      $region16: #{tpu_custom_call.1} parent=5 // pred_fallthru
        _
      %p150 = scmp.le.s32.totalorder 1, %s17
      %p151 = scmp.lt.s32.totalorder %s17, 3
      %p152 = pnand %p150, %p151
      %p153 = pneg %p152
      // Predicated region
      $region25: #{tpu_custom_call.1} parent=5 // pred_check
        _
      $region26: #{tpu_custom_call.1} parent=5 // pred_check_branch
        %155 = sbr.rel (%p152) target = $region28
      $region27: #{tpu_custom_call.1} parent=5 // pred_region
        %s156 = ssub.s32 %s17, 1
        %s157 = sand.u32 %s30, 1
        %s158 = scalar_lea.sflag [#allocation3], %s157
        %s159 = sand.u32 %s30, 1
        %s160 = smul.addr %s159, 8
        %s161 = scalar_lea.vmem [#allocation2], %s160
        // Predicated region
        $region29: #{tpu_custom_call.1} parent=27 // pred_check
          %p162 = pneg %p43
        $region30: #{tpu_custom_call.1} parent=27 // pred_check_branch
          %164 = sbr.rel (%p162) target = $region32
        $region31: #{tpu_custom_call.1} parent=27 // pred_region
          %165 = dma.done %s158, 128
        $region32: #{tpu_custom_call.1} parent=27 // pred_fallthru
          _
        %s166 = sand.u32 %s56, 1
        %s167 = scalar_lea.sflag [#allocation6], %s166
        %s168 = sand.u32 %s56, 1
        %s169 = smul.addr %s168, 8
        %s170 = scalar_lea.vmem [#allocation5], %s169
        // Predicated region
        $region33: #{tpu_custom_call.1} parent=27 // pred_check
          %p171 = pneg %p69
        $region34: #{tpu_custom_call.1} parent=27 // pred_check_branch
          %173 = sbr.rel (%p171) target = $region36
        $region35: #{tpu_custom_call.1} parent=27 // pred_region
          %174 = dma.done %s167, 128
        $region36: #{tpu_custom_call.1} parent=27 // pred_fallthru
          _
        %s175 = sand.u32 %s30, 1
        %s176 = scalar_lea.sflag [#allocation3], %s175
        %s177 = sand.u32 %s30, 1
        %s178 = smul.addr %s177, 8
        %s179 = scalar_lea.vmem [#allocation2], %s178
        %p180 = pneg %p43
        %p181 = pneg %p40
        %s182 = sand.u32 %s56, 1
        %s183 = scalar_lea.sflag [#allocation6], %s182
        %s184 = sand.u32 %s56, 1
        %s185 = smul.addr %s184, 8
        %s186 = scalar_lea.vmem [#allocation5], %s185
        %p187 = pneg %p69
        %p188 = pneg %p66
        %p189 = pneg %p95
        %p190 = pneg %p92
        %s191 = sand.u32 %s82, 1
        %s192 = scalar_lea.sflag [#allocation4], %s191
        %s193 = sand.u32 %s82, 1
        %s194 = smul.addr %s193, 8
        %s195 = scalar_lea.vmem [#allocation7], %s194
        %s196 = smul.u32 %s22, 8
        %v197 = vlaneseq
        %v198 = vshrl.u32 %v197, 7
        %v199 = vlaneseq
        %v200 = vand.u32 %v199, 127
        %v201 = vld [vmem:[%s161] sm:$0xff]
        %v202 = vld [vmem:[%s170] sm:$0xff]
        %v203 = vmax.f32 %v201, 0.0
        %v204 = vand.u32 2147483647, %v201
        %v205 = vsub.f32 0.0, %v204
        %v206 = vmul.f32 %v205, 1.442695
        %v207 = vpow.pop %v206
        %v208 = vadd.f32 %v207, 1.0
        %v209 = vlog2.pop %v208
        %v210 = vmul.f32 %v209, 0.6931472
        %v211 = vmul.f32 -0.5, %v207
        %v212 = vadd.f32 %v211, 1.0
        %v213 = vmul.f32 %v212, %v207
        %v214 = vand.u32 2147483647, %v207
        %vm215 = vcmp.lt.f32.partialorder %v214, 0.0004427343
        %v216 = vsel %vm215, %v213, %v210
        %v217 = vadd.f32 %v203, %v216
        %v218 = vsub.f32 %v217, %v201
        %v219 = vsub.f32 1.0, %v202
        %v220 = vmul.f32 %v219, %v217
        %v221 = vmul.f32 %v202, 2.13
        %v222 = vmul.f32 %v221, %v218
        %v223 = vadd.f32 %v220, %v222
        %v224 = vstv %s196
        %v225 = vadd.s32 %v224, %v198
        %v226 = vmul.u32 %v225, 128
        %v227 = vadd.s32 %v226, %v200
        %vm228 = vcmp.lt.s32.totalorder %v227, 1536
        %v229 = vsel %vm228, %v223, 0.0
        %v230 = vadd.f32 %v229, 0.0
        %231 = vst [vmem:[%s195] sm:$0xff] %v230
        %s232 = sand.u32 %s82, 1
        %s233 = scalar_lea.sflag [#allocation4], %s232
        %s234 = sand.u32 %s82, 1
        %s235 = smul.addr %s234, 8
        %s236 = scalar_lea.vmem [#allocation7], %s235
        // Predicated region
        $region37: #{tpu_custom_call.1} parent=27 // pred_check
          %p237 = pneg %p92
        $region38: #{tpu_custom_call.1} parent=27 // pred_check_branch
          %239 = sbr.rel (%p237) target = $region40
        $region39: #{tpu_custom_call.1} parent=27 // pred_region
          %s241 = ssub.s32 128, 128
          %242 = vsyncadd %s233, %s241
          %s243 = smul.addr %s22, 128
          %s244 = scalar_lea.hbm %s2, %s243
          %s246 = sshll.u32 %s236, 4
          %s247 = int_to_ptr.vmem [resolvable:$true] %s246
          %249 = dma.vmem_to_hbm [thread:$0]  %s247, 128, %s244, %s233
        $region40: #{tpu_custom_call.1} parent=27 // pred_fallthru
          _
      $region28: #{tpu_custom_call.1} parent=5 // pred_fallthru
        _
      %p250 = scmp.le.s32.totalorder 2, %s17
      // Predicated region
      $region41: #{tpu_custom_call.1} parent=5 // pred_check
        %p251 = pneg %p250
      $region42: #{tpu_custom_call.1} parent=5 // pred_check_branch
        %253 = sbr.rel (%p251) target = $region44
      $region43: #{tpu_custom_call.1} parent=5 // pred_region
        %s254 = ssub.s32 %s17, 2
        // Predicated region
        $region45: #{tpu_custom_call.1} parent=43 // pred_check
          %p255 = pneg %p98
        $region46: #{tpu_custom_call.1} parent=43 // pred_check_branch
          %257 = sbr.rel (%p255) target = $region48
        $region47: #{tpu_custom_call.1} parent=43 // pred_region
          %s258 = sand.u32 %s83, 1
          %s259 = scalar_lea.sflag [#allocation4], %s258
          %s260 = sand.u32 %s83, 1
          %s261 = smul.addr %s260, 8
          %s262 = scalar_lea.vmem [#allocation7], %s261
          %263 = dma.done %s259, 128
        $region48: #{tpu_custom_call.1} parent=43 // pred_fallthru
          _
      $region44: #{tpu_custom_call.1} parent=5 // pred_fallthru
        _
    $region6: #{tpu_custom_call.1} parent=1 // loop_footer
      %s21 = sadd.s32 1, %s17
    $region7: #{tpu_custom_call.1} parent=1 // loop_footer_branch
      %16 = sbr.rel target = $region3
    $region8: #{tpu_custom_call.1} parent=1 // loop_exit
      _
    %264 = vsyncpa [#allocation3], 1
    %s265 = scalar_lea.sflag [#allocation3], 1
    %266 = vsyncpa %s265, 1
    %267 = vsyncpa [#allocation6], 1
    %s268 = scalar_lea.sflag [#allocation6], 1
    %269 = vsyncpa %s268, 1
    %270 = vsyncpa [#allocation4], 1
    %s271 = scalar_lea.sflag [#allocation4], 1
    %272 = vsyncpa %s271, 1

</llo_original>
